<compile_context>
chip_gen: v7x
topology: tpu7x:2x2x1
jax: 0.10.0
libtpu: 0.0.40
codegen_flags: <defaults>
</compile_context>

<pallas_src>
import functools

import jax
import jax.numpy as jnp
from jax.experimental import pallas as pl
from jax.experimental.pallas import tpu as pltpu


def _round_up(n, m):
    return ((n + m - 1) // m) * m


def _pad2d(a, rows, cols):
    r, c = a.shape
    return jnp.pad(a, ((0, rows - r), (0, cols - c)))


def _scvae_kernel(
    x_ref, eps_ref,
    w1_ref, b1_ref, w2_ref, b2_ref,
    wmv_ref, bmv_ref,
    wd1_ref, bd1_ref, wd2_ref, bd2_ref, wd3_ref, bd3_ref,
    recon_ref, mu_ref, logvar_ref,
    *, latent_pad,
):
    f32 = jnp.float32

    def dense(a, w_ref, b_ref, relu):
        # bf16 matmul operands, f32 accumulation on the MXU.
        y = jnp.dot(a.astype(jnp.bfloat16), w_ref[...],
                    preferred_element_type=f32) + b_ref[...]
        if relu:
            y = jnp.maximum(y, 0.0)
        return y

    x = x_ref[...]            # already bf16 (cast once in the wrapper)

    # ---------------- encoder ----------------
    h = dense(x, w1_ref, b1_ref, relu=True)
    h = dense(h, w2_ref, b2_ref, relu=True)

    # Fused mu | log_var head (one MXU pass), lane-aligned static split.
    muvar = dense(h, wmv_ref, bmv_ref, relu=False)
    mu = muvar[:, :latent_pad]
    log_var = muvar[:, latent_pad:]

    # ------------- reparameterize (f32 elementwise, EUP exp) ---------------
    std = jnp.exp(0.5 * log_var)
    z = mu + eps_ref[...] * std

    # ---------------- decoder ----------------
    d = dense(z, wd1_ref, bd1_ref, relu=True)
    d = dense(d, wd2_ref, bd2_ref, relu=True)
    recon = dense(d, wd3_ref, bd3_ref, relu=False)

    recon_ref[...] = recon
    mu_ref[...] = mu
    logvar_ref[...] = log_var


def scvae_forward(x, eps, params, *, block_batch=256):
    """Fused SCVAE forward.

    x:      (B, input_dim) f32
    eps:    (B, latent_dim) f32 standard-normal noise
    params: dict of pre-transposed weights (in, out) and biases (1, out), f32.
    Returns (reconstruction, mu, log_var), each f32 and unpadded.
    """
    B, input_dim = x.shape
    latent_dim = eps.shape[1]
    hidden1 = params["w1"].shape[1]
    hidden2 = params["w2"].shape[1]

    f32, bf16 = jnp.float32, jnp.bfloat16

    # Lane-dense padded feature dims.
    D = _round_up(input_dim, 128)
    H1 = _round_up(hidden1, 128)
    H2 = _round_up(hidden2, 128)
    L = _round_up(latent_dim, 128)

    # Batch tile: largest multiple of 8 <= block_batch that covers B, then pad
    # B up to a multiple of it.  Comfortably inside 32 MiB scoped VMEM even
    # with double-buffered batch tiles at these padded widths.
    TB = min(block_batch, _round_up(B, 8))
    Bp = _round_up(B, TB)

    # Pad activations (zeros) -- padded rows/lanes are sliced off at the end.
    # x is cast to bf16 once here: it is only ever an MXU operand.
    xp = _pad2d(x.astype(bf16), Bp, D)
    epsp = _pad2d(eps.astype(f32), Bp, L)

    # Pad + cast weights once (bf16 MXU operands); biases stay f32.
    w1 = _pad2d(params["w1"], D, H1).astype(bf16)
    b1 = _pad2d(params["b1"], 1, H1).astype(f32)
    w2 = _pad2d(params["w2"], H1, H2).astype(bf16)
    b2 = _pad2d(params["b2"], 1, H2).astype(f32)
    # Fused mu|log_var head.
    wmv = jnp.concatenate(
        [_pad2d(params["wmu"], H2, L), _pad2d(params["wvar"], H2, L)],
        axis=1).astype(bf16)
    bmv = jnp.concatenate(
        [_pad2d(params["bmu"], 1, L), _pad2d(params["bvar"], 1, L)],
        axis=1).astype(f32)
    wd1 = _pad2d(params["wd1"], L, H2).astype(bf16)
    bd1 = _pad2d(params["bd1"], 1, H2).astype(f32)
    wd2 = _pad2d(params["wd2"], H2, H1).astype(bf16)
    bd2 = _pad2d(params["bd2"], 1, H1).astype(f32)
    wd3 = _pad2d(params["wd3"], H1, D).astype(bf16)
    bd3 = _pad2d(params["bd3"], 1, D).astype(f32)

    operands = (xp, epsp,
                w1, b1, w2, b2, wmv, bmv,
                wd1, bd1, wd2, bd2, wd3, bd3)

    grid = (Bp // TB,)

    def batch_spec(cols):
        return pl.BlockSpec((TB, cols), lambda i: (i, 0))

    def resident_spec(arr):
        # Full-array block + constant block index => fetched once, stays
        # resident in VMEM across all grid steps.
        return pl.BlockSpec(arr.shape, lambda i: (0, 0))

    in_specs = ([batch_spec(D), batch_spec(L)]
                + [resident_spec(a) for a in operands[2:]])
    out_specs = (batch_spec(D), batch_spec(L), batch_spec(L))
    out_shape = (
        jax.ShapeDtypeStruct((Bp, D), f32),   # reconstruction (padded)
        jax.ShapeDtypeStruct((Bp, L), f32),   # mu (padded)
        jax.ShapeDtypeStruct((Bp, L), f32),   # log_var (padded)
    )

    # Advisory cost estimate for XLA's scheduler.
    matmul_dims = [(D, H1), (H1, H2), (H2, 2 * L), (L, H2), (H2, H1), (H1, D)]
    flops = 2 * Bp * sum(i * o for i, o in matmul_dims)
    bytes_accessed = (sum(int(a.nbytes) for a in operands)
                      + Bp * (D + L + L) * 4)
    cost = pl.CostEstimate(flops=flops,
                           transcendentals=Bp * L,
                           bytes_accessed=bytes_accessed)

    recon_p, mu_p, logvar_p = pl.pallas_call(
        functools.partial(_scvae_kernel, latent_pad=L),
        out_shape=out_shape,
        grid=grid,
        in_specs=in_specs,
        out_specs=out_specs,
        compiler_params=pltpu.CompilerParams(
            dimension_semantics=("parallel",),   # megacore split on v7x
            vmem_limit_bytes=32 * 1024 * 1024,   # safe on v5e/v6e/v7x
        ),
        cost_estimate=cost,
    )(*operands)

    return (recon_p[:B, :input_dim],
            mu_p[:B, :latent_dim],
            logvar_p[:B, :latent_dim])


def init_params(key, input_dim, hidden_dims, latent_dim):
    """Deterministic synthetic parameter init (Gaussian * 0.1, zero bias)."""
    dims = {
        "w1": (input_dim, hidden_dims[0]),
        "w2": (hidden_dims[0], hidden_dims[1]),
        "wmu": (hidden_dims[1], latent_dim),
        "wvar": (hidden_dims[1], latent_dim),
        "wd1": (latent_dim, hidden_dims[1]),
        "wd2": (hidden_dims[1], hidden_dims[0]),
        "wd3": (hidden_dims[0], input_dim),
    }
    params = {}
    keys = jax.random.split(key, len(dims))
    for k, (name, shape) in zip(keys, dims.items()):
        params[name] = (0.1 * jax.random.normal(k, shape)).astype(jnp.float32)
        params["b" + name[1:]] = jnp.zeros((1, shape[1]), dtype=jnp.float32)
    return params


def scvae_reference(x, eps, params):
    """Pure-JAX reference with the same bf16-in / f32-accumulate matmuls."""
    bf16, f32 = jnp.bfloat16, jnp.float32

    def dense(a, w, b, relu):
        y = jnp.dot(a.astype(bf16), w.astype(bf16),
                    preferred_element_type=f32) + b
        return jnp.maximum(y, 0.0) if relu else y

    h = dense(x, params["w1"], params["b1"], True)
    h = dense(h, params["w2"], params["b2"], True)
    mu = dense(h, params["wmu"], params["bmu"], False)
    log_var = dense(h, params["wvar"], params["bvar"], False)
    z = mu + eps * jnp.exp(0.5 * log_var)
    d = dense(z, params["wd1"], params["bd1"], True)
    d = dense(d, params["wd2"], params["bd2"], True)
    recon = dense(d, params["wd3"], params["bd3"], False)
    return recon, mu, log_var


if __name__ == "__main__":
    # Small shapes consistent with the module's forward (dense MLP VAE).
    B = 8
    input_dim = 16
    hidden_dims = [32, 24]
    latent_dim = 8

    key = jax.random.PRNGKey(0)
    k_x, k_eps, k_params = jax.random.split(key, 3)

    x = jax.random.normal(k_x, (B, input_dim), dtype=jnp.float32)
    eps = jax.random.normal(k_eps, (B, latent_dim), dtype=jnp.float32)
    params = init_params(k_params, input_dim, hidden_dims, latent_dim)

    recon, mu, log_var = scvae_forward(x, eps, params)
    jax.block_until_ready((recon, mu, log_var))

    # Correctness check against the pure-JAX reference.
    r_ref, mu_ref, lv_ref = scvae_reference(x, eps, params)
    assert recon.shape == (B, input_dim)
    assert mu.shape == (B, latent_dim) and log_var.shape == (B, latent_dim)
    assert jnp.allclose(recon, r_ref, atol=2e-3, rtol=2e-3)
    assert jnp.allclose(mu, mu_ref, atol=2e-3, rtol=2e-3)
    assert jnp.allclose(log_var, lv_ref, atol=2e-3, rtol=2e-3)

    print("KERNEL_OK")
</pallas_src>

<mosaic_0001>
module attributes {stable_mosaic.version = 11 : i64} {
  func.func @_scvae_kernel(%arg0: i32, %arg1: memref<8x128xbf16, #tpu.memory_space<vmem>>, %arg2: memref<8x128xf32, #tpu.memory_space<vmem>>, %arg3: memref<128x128xbf16, #tpu.memory_space<vmem>>, %arg4: memref<1x128xf32, #tpu.memory_space<vmem>>, %arg5: memref<128x128xbf16, #tpu.memory_space<vmem>>, %arg6: memref<1x128xf32, #tpu.memory_space<vmem>>, %arg7: memref<128x256xbf16, #tpu.memory_space<vmem>>, %arg8: memref<1x256xf32, #tpu.memory_space<vmem>>, %arg9: memref<128x128xbf16, #tpu.memory_space<vmem>>, %arg10: memref<1x128xf32, #tpu.memory_space<vmem>>, %arg11: memref<128x128xbf16, #tpu.memory_space<vmem>>, %arg12: memref<1x128xf32, #tpu.memory_space<vmem>>, %arg13: memref<128x128xbf16, #tpu.memory_space<vmem>>, %arg14: memref<1x128xf32, #tpu.memory_space<vmem>>, %arg15: memref<8x128xf32, #tpu.memory_space<vmem>>, %arg16: memref<8x128xf32, #tpu.memory_space<vmem>>, %arg17: memref<8x128xf32, #tpu.memory_space<vmem>>) attributes {dimension_semantics = [#tpu.dimension_semantics<parallel>], iteration_bounds = array<i64: 1>, scalar_prefetch = 0 : i64, scratch_operands = 0 : i64, tpu.core_type = #tpu.core_type<tc>, window_params = [{transform_indices = @transform_0, window_bounds = array<i64: 8, 128>}, {transform_indices = @transform_1, window_bounds = array<i64: 8, 128>}, {pipeline_mode = #tpu.pipeline_mode<synchronous>, transform_indices = @transform_2, window_bounds = array<i64: 128, 128>}, {pipeline_mode = #tpu.pipeline_mode<synchronous>, transform_indices = @transform_3, window_bounds = array<i64: 1, 128>}, {pipeline_mode = #tpu.pipeline_mode<synchronous>, transform_indices = @transform_4, window_bounds = array<i64: 128, 128>}, {pipeline_mode = #tpu.pipeline_mode<synchronous>, transform_indices = @transform_5, window_bounds = array<i64: 1, 128>}, {pipeline_mode = #tpu.pipeline_mode<synchronous>, transform_indices = @transform_6, window_bounds = array<i64: 128, 256>}, {pipeline_mode = #tpu.pipeline_mode<synchronous>, transform_indices = @transform_7, window_bounds = array<i64: 1, 256>}, {pipeline_mode = #tpu.pipeline_mode<synchronous>, transform_indices = @transform_8, window_bounds = array<i64: 128, 128>}, {pipeline_mode = #tpu.pipeline_mode<synchronous>, transform_indices = @transform_9, window_bounds = array<i64: 1, 128>}, {pipeline_mode = #tpu.pipeline_mode<synchronous>, transform_indices = @transform_10, window_bounds = array<i64: 128, 128>}, {pipeline_mode = #tpu.pipeline_mode<synchronous>, transform_indices = @transform_11, window_bounds = array<i64: 1, 128>}, {pipeline_mode = #tpu.pipeline_mode<synchronous>, transform_indices = @transform_12, window_bounds = array<i64: 128, 128>}, {pipeline_mode = #tpu.pipeline_mode<synchronous>, transform_indices = @transform_13, window_bounds = array<i64: 1, 128>}, {transform_indices = @transform_14, window_bounds = array<i64: 8, 128>}, {transform_indices = @transform_15, window_bounds = array<i64: 8, 128>}, {transform_indices = @transform_16, window_bounds = array<i64: 8, 128>}]} {
    %c0 = arith.constant 0 : index
    %c0_0 = arith.constant 0 : index
    %0 = vector.load %arg1[%c0, %c0_0] : memref<8x128xbf16, #tpu.memory_space<vmem>>, vector<8x128xbf16>
    %c0_1 = arith.constant 0 : index
    %c0_2 = arith.constant 0 : index
    %1 = vector.load %arg3[%c0_1, %c0_2] : memref<128x128xbf16, #tpu.memory_space<vmem>>, vector<128x128xbf16>
    %cst = arith.constant dense<0.000000e+00> : vector<8x128xf32>
    %2 = tpu.matmul %0, %1, %cst {dimension_numbers = #tpu.dot_dimension_numbers<[1], [0], [0], [1], [0, 0, 1, 1], [], []>} : vector<8x128xbf16>, vector<128x128xbf16>, vector<8x128xf32> -> vector<8x128xf32>
    %c0_3 = arith.constant 0 : index
    %c0_4 = arith.constant 0 : index
    %3 = vector.load %arg4[%c0_3, %c0_4] : memref<1x128xf32, #tpu.memory_space<vmem>>, vector<1x128xf32>
    %4 = vector.broadcast %3 : vector<1x128xf32> to vector<8x128xf32>
    %5 = arith.addf %2, %4 : vector<8x128xf32>
    %cst_5 = arith.constant 0.000000e+00 : f32
    %6 = vector.broadcast %cst_5 : f32 to vector<8x128xf32>
    %7 = arith.maximumf %5, %6 : vector<8x128xf32>
    %8 = arith.truncf %7 : vector<8x128xf32> to vector<8x128xbf16>
    %c0_6 = arith.constant 0 : index
    %c0_7 = arith.constant 0 : index
    %9 = vector.load %arg5[%c0_6, %c0_7] : memref<128x128xbf16, #tpu.memory_space<vmem>>, vector<128x128xbf16>
    %cst_8 = arith.constant dense<0.000000e+00> : vector<8x128xf32>
    %10 = tpu.matmul %8, %9, %cst_8 {dimension_numbers = #tpu.dot_dimension_numbers<[1], [0], [0], [1], [0, 0, 1, 1], [], []>} : vector<8x128xbf16>, vector<128x128xbf16>, vector<8x128xf32> -> vector<8x128xf32>
    %c0_9 = arith.constant 0 : index
    %c0_10 = arith.constant 0 : index
    %11 = vector.load %arg6[%c0_9, %c0_10] : memref<1x128xf32, #tpu.memory_space<vmem>>, vector<1x128xf32>
    %12 = vector.broadcast %11 : vector<1x128xf32> to vector<8x128xf32>
    %13 = arith.addf %10, %12 : vector<8x128xf32>
    %cst_11 = arith.constant 0.000000e+00 : f32
    %14 = vector.broadcast %cst_11 : f32 to vector<8x128xf32>
    %15 = arith.maximumf %13, %14 : vector<8x128xf32>
    %16 = arith.truncf %15 : vector<8x128xf32> to vector<8x128xbf16>
    %c0_12 = arith.constant 0 : index
    %c0_13 = arith.constant 0 : index
    %17 = vector.load %arg7[%c0_12, %c0_13] : memref<128x256xbf16, #tpu.memory_space<vmem>>, vector<128x256xbf16>
    %cst_14 = arith.constant dense<0.000000e+00> : vector<8x256xf32>
    %18 = tpu.matmul %16, %17, %cst_14 {dimension_numbers = #tpu.dot_dimension_numbers<[1], [0], [0], [1], [0, 0, 1, 1], [], []>} : vector<8x128xbf16>, vector<128x256xbf16>, vector<8x256xf32> -> vector<8x256xf32>
    %c0_15 = arith.constant 0 : index
    %c0_16 = arith.constant 0 : index
    %19 = vector.load %arg8[%c0_15, %c0_16] : memref<1x256xf32, #tpu.memory_space<vmem>>, vector<1x256xf32>
    %20 = vector.broadcast %19 : vector<1x256xf32> to vector<8x256xf32>
    %21 = arith.addf %18, %20 : vector<8x256xf32>
    %22 = vector.extract_strided_slice %21 {offsets = [0, 0], sizes = [8, 128], strides = [1, 1]} : vector<8x256xf32> to vector<8x128xf32>
    %23 = vector.extract_strided_slice %21 {offsets = [0, 128], sizes = [8, 128], strides = [1, 1]} : vector<8x256xf32> to vector<8x128xf32>
    %cst_17 = arith.constant 5.000000e-01 : f32
    %24 = vector.broadcast %cst_17 : f32 to vector<8x128xf32>
    %25 = arith.mulf %24, %23 : vector<8x128xf32>
    %26 = math.exp %25 : vector<8x128xf32>
    %c0_18 = arith.constant 0 : index
    %c0_19 = arith.constant 0 : index
    %27 = vector.load %arg2[%c0_18, %c0_19] : memref<8x128xf32, #tpu.memory_space<vmem>>, vector<8x128xf32>
    %28 = arith.mulf %27, %26 : vector<8x128xf32>
    %29 = arith.addf %22, %28 : vector<8x128xf32>
    %30 = arith.truncf %29 : vector<8x128xf32> to vector<8x128xbf16>
    %c0_20 = arith.constant 0 : index
    %c0_21 = arith.constant 0 : index
    %31 = vector.load %arg9[%c0_20, %c0_21] : memref<128x128xbf16, #tpu.memory_space<vmem>>, vector<128x128xbf16>
    %cst_22 = arith.constant dense<0.000000e+00> : vector<8x128xf32>
    %32 = tpu.matmul %30, %31, %cst_22 {dimension_numbers = #tpu.dot_dimension_numbers<[1], [0], [0], [1], [0, 0, 1, 1], [], []>} : vector<8x128xbf16>, vector<128x128xbf16>, vector<8x128xf32> -> vector<8x128xf32>
    %c0_23 = arith.constant 0 : index
    %c0_24 = arith.constant 0 : index
    %33 = vector.load %arg10[%c0_23, %c0_24] : memref<1x128xf32, #tpu.memory_space<vmem>>, vector<1x128xf32>
    %34 = vector.broadcast %33 : vector<1x128xf32> to vector<8x128xf32>
    %35 = arith.addf %32, %34 : vector<8x128xf32>
    %cst_25 = arith.constant 0.000000e+00 : f32
    %36 = vector.broadcast %cst_25 : f32 to vector<8x128xf32>
    %37 = arith.maximumf %35, %36 : vector<8x128xf32>
    %38 = arith.truncf %37 : vector<8x128xf32> to vector<8x128xbf16>
    %c0_26 = arith.constant 0 : index
    %c0_27 = arith.constant 0 : index
    %39 = vector.load %arg11[%c0_26, %c0_27] : memref<128x128xbf16, #tpu.memory_space<vmem>>, vector<128x128xbf16>
    %cst_28 = arith.constant dense<0.000000e+00> : vector<8x128xf32>
    %40 = tpu.matmul %38, %39, %cst_28 {dimension_numbers = #tpu.dot_dimension_numbers<[1], [0], [0], [1], [0, 0, 1, 1], [], []>} : vector<8x128xbf16>, vector<128x128xbf16>, vector<8x128xf32> -> vector<8x128xf32>
    %c0_29 = arith.constant 0 : index
    %c0_30 = arith.constant 0 : index
    %41 = vector.load %arg12[%c0_29, %c0_30] : memref<1x128xf32, #tpu.memory_space<vmem>>, vector<1x128xf32>
    %42 = vector.broadcast %41 : vector<1x128xf32> to vector<8x128xf32>
    %43 = arith.addf %40, %42 : vector<8x128xf32>
    %cst_31 = arith.constant 0.000000e+00 : f32
    %44 = vector.broadcast %cst_31 : f32 to vector<8x128xf32>
    %45 = arith.maximumf %43, %44 : vector<8x128xf32>
    %46 = arith.truncf %45 : vector<8x128xf32> to vector<8x128xbf16>
    %c0_32 = arith.constant 0 : index
    %c0_33 = arith.constant 0 : index
    %47 = vector.load %arg13[%c0_32, %c0_33] : memref<128x128xbf16, #tpu.memory_space<vmem>>, vector<128x128xbf16>
    %cst_34 = arith.constant dense<0.000000e+00> : vector<8x128xf32>
    %48 = tpu.matmul %46, %47, %cst_34 {dimension_numbers = #tpu.dot_dimension_numbers<[1], [0], [0], [1], [0, 0, 1, 1], [], []>} : vector<8x128xbf16>, vector<128x128xbf16>, vector<8x128xf32> -> vector<8x128xf32>
    %c0_35 = arith.constant 0 : index
    %c0_36 = arith.constant 0 : index
    %49 = vector.load %arg14[%c0_35, %c0_36] : memref<1x128xf32, #tpu.memory_space<vmem>>, vector<1x128xf32>
    %50 = vector.broadcast %49 : vector<1x128xf32> to vector<8x128xf32>
    %51 = arith.addf %48, %50 : vector<8x128xf32>
    %c0_37 = arith.constant 0 : index
    %c0_38 = arith.constant 0 : index
    %52 = vector.load %arg15[%c0_37, %c0_38] : memref<8x128xf32, #tpu.memory_space<vmem>>, vector<8x128xf32>
    tpu.vector_store %arg15[%c0_37, %c0_38], %51 {strides = array<i32>} : memref<8x128xf32, #tpu.memory_space<vmem>>, vector<8x128xf32>,
    %c0_39 = arith.constant 0 : index
    %c0_40 = arith.constant 0 : index
    %53 = vector.load %arg16[%c0_39, %c0_40] : memref<8x128xf32, #tpu.memory_space<vmem>>, vector<8x128xf32>
    tpu.vector_store %arg16[%c0_39, %c0_40], %22 {strides = array<i32>} : memref<8x128xf32, #tpu.memory_space<vmem>>, vector<8x128xf32>,
    %c0_41 = arith.constant 0 : index
    %c0_42 = arith.constant 0 : index
    %54 = vector.load %arg17[%c0_41, %c0_42] : memref<8x128xf32, #tpu.memory_space<vmem>>, vector<8x128xf32>
    tpu.vector_store %arg17[%c0_41, %c0_42], %23 {strides = array<i32>} : memref<8x128xf32, #tpu.memory_space<vmem>>, vector<8x128xf32>,
    return
  }
  func.func @transform_0(%arg0: i32) -> (i32, i32) {
    %c0_i32 = arith.constant 0 : i32
    %c0_i32_0 = arith.constant 0 : i32
    return %arg0, %c0_i32 : i32, i32
  }
  func.func @transform_1(%arg0: i32) -> (i32, i32) {
    %c0_i32 = arith.constant 0 : i32
    %c0_i32_0 = arith.constant 0 : i32
    return %arg0, %c0_i32 : i32, i32
  }
  func.func @transform_2(%arg0: i32) -> (i32, i32) {
    %c0_i32 = arith.constant 0 : i32
    %c0_i32_0 = arith.constant 0 : i32
    %c0_i32_1 = arith.constant 0 : i32
    return %c0_i32, %c0_i32_0 : i32, i32
  }
  func.func @transform_3(%arg0: i32) -> (i32, i32) {
    %c0_i32 = arith.constant 0 : i32
    %c0_i32_0 = arith.constant 0 : i32
    %c0_i32_1 = arith.constant 0 : i32
    return %c0_i32, %c0_i32_0 : i32, i32
  }
  func.func @transform_4(%arg0: i32) -> (i32, i32) {
    %c0_i32 = arith.constant 0 : i32
    %c0_i32_0 = arith.constant 0 : i32
    %c0_i32_1 = arith.constant 0 : i32
    return %c0_i32, %c0_i32_0 : i32, i32
  }
  func.func @transform_5(%arg0: i32) -> (i32, i32) {
    %c0_i32 = arith.constant 0 : i32
    %c0_i32_0 = arith.constant 0 : i32
    %c0_i32_1 = arith.constant 0 : i32
    return %c0_i32, %c0_i32_0 : i32, i32
  }
  func.func @transform_6(%arg0: i32) -> (i32, i32) {
    %c0_i32 = arith.constant 0 : i32
    %c0_i32_0 = arith.constant 0 : i32
    %c0_i32_1 = arith.constant 0 : i32
    return %c0_i32, %c0_i32_0 : i32, i32
  }
  func.func @transform_7(%arg0: i32) -> (i32, i32) {
    %c0_i32 = arith.constant 0 : i32
    %c0_i32_0 = arith.constant 0 : i32
    %c0_i32_1 = arith.constant 0 : i32
    return %c0_i32, %c0_i32_0 : i32, i32
  }
  func.func @transform_8(%arg0: i32) -> (i32, i32) {
    %c0_i32 = arith.constant 0 : i32
    %c0_i32_0 = arith.constant 0 : i32
    %c0_i32_1 = arith.constant 0 : i32
    return %c0_i32, %c0_i32_0 : i32, i32
  }
  func.func @transform_9(%arg0: i32) -> (i32, i32) {
    %c0_i32 = arith.constant 0 : i32
    %c0_i32_0 = arith.constant 0 : i32
    %c0_i32_1 = arith.constant 0 : i32
    return %c0_i32, %c0_i32_0 : i32, i32
  }
  func.func @transform_10(%arg0: i32) -> (i32, i32) {
    %c0_i32 = arith.constant 0 : i32
    %c0_i32_0 = arith.constant 0 : i32
    %c0_i32_1 = arith.constant 0 : i32
    return %c0_i32, %c0_i32_0 : i32, i32
  }
  func.func @transform_11(%arg0: i32) -> (i32, i32) {
    %c0_i32 = arith.constant 0 : i32
    %c0_i32_0 = arith.constant 0 : i32
    %c0_i32_1 = arith.constant 0 : i32
    return %c0_i32, %c0_i32_0 : i32, i32
  }
  func.func @transform_12(%arg0: i32) -> (i32, i32) {
    %c0_i32 = arith.constant 0 : i32
    %c0_i32_0 = arith.constant 0 : i32
    %c0_i32_1 = arith.constant 0 : i32
    return %c0_i32, %c0_i32_0 : i32, i32
  }
  func.func @transform_13(%arg0: i32) -> (i32, i32) {
    %c0_i32 = arith.constant 0 : i32
    %c0_i32_0 = arith.constant 0 : i32
    %c0_i32_1 = arith.constant 0 : i32
    return %c0_i32, %c0_i32_0 : i32, i32
  }
  func.func @transform_14(%arg0: i32) -> (i32, i32) {
    %c0_i32 = arith.constant 0 : i32
    %c0_i32_0 = arith.constant 0 : i32
    return %arg0, %c0_i32 : i32, i32
  }
  func.func @transform_15(%arg0: i32) -> (i32, i32) {
    %c0_i32 = arith.constant 0 : i32
    %c0_i32_0 = arith.constant 0 : i32
    return %arg0, %c0_i32 : i32, i32
  }
  func.func @transform_16(%arg0: i32) -> (i32, i32) {
    %c0_i32 = arith.constant 0 : i32
    %c0_i32_0 = arith.constant 0 : i32
    return %arg0, %c0_i32 : i32, i32
  }
}

</mosaic_0001>

<llo_original>
// kernel: tpu_custom_call.1
$region0: #{tpu_custom_call.1}
  #allocation0 [shape = 'u32[]', space=smem, size = 0x4, offset = 0x4, fixed_abs, tag = 'smem constant byte address 0x4 - core index']
  #allocation1 [shape = 'u32[144,128]{1,0:T(1,128)}', space=vmem, size = 0x12000, scoped, tag = 'internal scratch']
  %s0 = inlined_call_operand.hbm [shape: bf16[8,128], index: 0, kind: input, shape index: {}]
  %s1 = inlined_call_operand.hbm [shape: f32[8,128], index: 1, kind: input, shape index: {}]
  %s2 = inlined_call_operand.hbm [shape: bf16[128,128], index: 2, kind: input, shape index: {}]
  %s3 = inlined_call_operand.vmem [shape: f32[1,128], index: 3, kind: input, shape index: {}]
  %s4 = inlined_call_operand.hbm [shape: bf16[128,128], index: 4, kind: input, shape index: {}]
  %s5 = inlined_call_operand.vmem [shape: f32[1,128], index: 5, kind: input, shape index: {}]
  %s6 = inlined_call_operand.hbm [shape: bf16[128,256], index: 6, kind: input, shape index: {}]
  %s7 = inlined_call_operand.vmem [shape: f32[1,256], index: 7, kind: input, shape index: {}]
  %s8 = inlined_call_operand.hbm [shape: bf16[128,128], index: 8, kind: input, shape index: {}]
  %s9 = inlined_call_operand.vmem [shape: f32[1,128], index: 9, kind: input, shape index: {}]
  %s10 = inlined_call_operand.hbm [shape: bf16[128,128], index: 10, kind: input, shape index: {}]
  %s11 = inlined_call_operand.vmem [shape: f32[1,128], index: 11, kind: input, shape index: {}]
  %s12 = inlined_call_operand.hbm [shape: bf16[128,128], index: 12, kind: input, shape index: {}]
  %s13 = inlined_call_operand.vmem [shape: f32[1,128], index: 13, kind: input, shape index: {}]
  %s14 = inlined_call_operand.hbm [shape: f32[8,128], index: 14, kind: output, shape index: {0}]
  %s15 = inlined_call_operand.hbm [shape: f32[8,128], index: 15, kind: output, shape index: {1}]
  %s16 = inlined_call_operand.hbm [shape: f32[8,128], index: 16, kind: output, shape index: {2}]
  %17 = xla_tuple %s14, %s15, %s16
  %s18 = sld [smem:[#allocation0]]
  $region114: #{tpu_custom_call.1} parent=0
    _
  %s20 = ssub.s32 1, %s18
  %s21 = scalar_select 0, %s20, %s18
  $region1: #{tpu_custom_call.1} parent=0
    #allocation2 [shape = 'u8[2048]{0}', space=vmem, size = 0x800, scoped, tag = 'input window, operand 0, single buffered']
    #allocation3 [shape = 's32[1]{0}', space=sflag, size = 0x4, scoped, tag = 'scoped memory for tpu_custom_call.1']
    #allocation4 [shape = 's32[1]{0}', space=sflag, size = 0x4, scoped, tag = 'scoped memory for tpu_custom_call.1']
    #allocation5 [shape = 'u8[4096]{0}', space=vmem, size = 0x1000, scoped, tag = 'input window, operand 1, single buffered']
    #allocation6 [shape = 's32[1]{0}', space=sflag, size = 0x4, scoped, tag = 'scoped memory for tpu_custom_call.1']
    #allocation7 [shape = 'u8[32768]{0}', space=vmem, size = 0x8000, scoped, tag = 'input window, operand 2, single buffered']
    #allocation8 [shape = 'u8[32768]{0}', space=vmem, size = 0x8000, scoped, tag = 'input window, operand 4, single buffered']
    #allocation9 [shape = 's32[1]{0}', space=sflag, size = 0x4, scoped, tag = 'scoped memory for tpu_custom_call.1']
    #allocation10 [shape = 'u8[65536]{0}', space=vmem, size = 0x10000, scoped, tag = 'input window, operand 6, single buffered']
    #allocation11 [shape = 'u8[32768]{0}', space=vmem, size = 0x8000, scoped, tag = 'input window, operand 8, single buffered']
    #allocation12 [shape = 's32[1]{0}', space=sflag, size = 0x4, scoped, tag = 'scoped memory for tpu_custom_call.1']
    #allocation13 [shape = 'u8[32768]{0}', space=vmem, size = 0x8000, scoped, tag = 'input window, operand 10, single buffered']
    #allocation14 [shape = 'u8[32768]{0}', space=vmem, size = 0x8000, scoped, tag = 'input window, operand 12, single buffered']
    #allocation15 [shape = 's32[1]{0}', space=sflag, size = 0x4, scoped, tag = 'scoped memory for tpu_custom_call.1']
    #allocation16 [shape = 'u8[4096]{0}', space=vmem, size = 0x1000, scoped, tag = 'output window, operand 0, single buffered']
    #allocation17 [shape = 'u8[4096]{0}', space=vmem, size = 0x1000, scoped, tag = 'output window, operand 1, single buffered']
    #allocation18 [shape = 's32[1]{0}', space=sflag, size = 0x4, scoped, tag = 'scoped memory for tpu_custom_call.1']
    #allocation19 [shape = 'u8[4096]{0}', space=vmem, size = 0x1000, scoped, tag = 'output window, operand 2, single buffered']
    %22 = vsyncpa [#allocation3], 0
    %23 = vsyncpa [#allocation6], 0
    %24 = vsyncpa [#allocation9], 0
    %25 = vsyncpa [#allocation12], 0
    %26 = vsyncpa [#allocation15], 0
    %27 = vsyncpa [#allocation4], 0
    %28 = vsyncpa [#allocation18], 0
    // Predicated region
    $region2: #{tpu_custom_call.1} parent=1 // pred_check
      _
    $region3: #{tpu_custom_call.1} parent=1 // pred_check_branch
      %30 = sbr.rel (0) target = $region5
    $region4: #{tpu_custom_call.1} parent=1 // pred_region
      %s32 = ssub.s32 64, 64
      %33 = vsyncadd [#allocation3], %s32
      %s35 = sshll.u32 [#allocation2], 4
      %s36 = int_to_ptr.vmem [resolvable:$true] %s35
      %38 = dma.hbm_to_vmem [thread:$0]  %s0, 64, %s36, [#allocation3]
    $region5: #{tpu_custom_call.1} parent=1 // pred_fallthru
      _
    // Predicated region
    $region6: #{tpu_custom_call.1} parent=1 // pred_check
      _
    $region7: #{tpu_custom_call.1} parent=1 // pred_check_branch
      %40 = sbr.rel (0) target = $region9
    $region8: #{tpu_custom_call.1} parent=1 // pred_region
      %s42 = ssub.s32 128, 128
      %43 = vsyncadd [#allocation6], %s42
      %s45 = sshll.u32 [#allocation5], 4
      %s46 = int_to_ptr.vmem [resolvable:$true] %s45
      %48 = dma.hbm_to_vmem [thread:$0]  %s1, 128, %s46, [#allocation6]
    $region9: #{tpu_custom_call.1} parent=1 // pred_fallthru
      _
    // Predicated region
    $region10: #{tpu_custom_call.1} parent=1 // pred_check
      _
    $region11: #{tpu_custom_call.1} parent=1 // pred_check_branch
      %50 = sbr.rel (0) target = $region13
    $region12: #{tpu_custom_call.1} parent=1 // pred_region
      %s52 = ssub.s32 1024, 1024
      %53 = vsyncadd [#allocation6], %s52
      %s54 = sshll.u32 [#allocation7], 4
      %s55 = int_to_ptr.vmem [resolvable:$true] %s54
      %60 = dma.hbm_to_vmem [thread:$0]  %s2, 1024, %s55, [#allocation6], 64, 64, 4
    $region13: #{tpu_custom_call.1} parent=1 // pred_fallthru
      _
    // Predicated region
    $region14: #{tpu_custom_call.1} parent=1 // pred_check
      _
    $region15: #{tpu_custom_call.1} parent=1 // pred_check_branch
      %62 = sbr.rel (0) target = $region17
    $region16: #{tpu_custom_call.1} parent=1 // pred_region
      _
    $region17: #{tpu_custom_call.1} parent=1 // pred_fallthru
      _
    // Predicated region
    $region18: #{tpu_custom_call.1} parent=1 // pred_check
      _
    $region19: #{tpu_custom_call.1} parent=1 // pred_check_branch
      %64 = sbr.rel (0) target = $region21
    $region20: #{tpu_custom_call.1} parent=1 // pred_region
      %s66 = ssub.s32 1024, 1024
      %67 = vsyncadd [#allocation9], %s66
      %s68 = sshll.u32 [#allocation8], 4
      %s69 = int_to_ptr.vmem [resolvable:$true] %s68
      %74 = dma.hbm_to_vmem [thread:$0]  %s4, 1024, %s69, [#allocation9], 64, 64, 4
    $region21: #{tpu_custom_call.1} parent=1 // pred_fallthru
      _
    // Predicated region
    $region22: #{tpu_custom_call.1} parent=1 // pred_check
      _
    $region23: #{tpu_custom_call.1} parent=1 // pred_check_branch
      %76 = sbr.rel (0) target = $region25
    $region24: #{tpu_custom_call.1} parent=1 // pred_region
      _
    $region25: #{tpu_custom_call.1} parent=1 // pred_fallthru
      _
    // Predicated region
    $region26: #{tpu_custom_call.1} parent=1 // pred_check
      _
    $region27: #{tpu_custom_call.1} parent=1 // pred_check_branch
      %78 = sbr.rel (0) target = $region29
    $region28: #{tpu_custom_call.1} parent=1 // pred_region
      %s80 = ssub.s32 2048, 2048
      %81 = vsyncadd [#allocation9], %s80
      %s82 = sshll.u32 [#allocation10], 4
      %s83 = int_to_ptr.vmem [resolvable:$true] %s82
      %88 = dma.hbm_to_vmem [thread:$0]  %s6, 2048, %s83, [#allocation9], 128, 128, 8
    $region29: #{tpu_custom_call.1} parent=1 // pred_fallthru
      _
    // Predicated region
    $region30: #{tpu_custom_call.1} parent=1 // pred_check
      _
    $region31: #{tpu_custom_call.1} parent=1 // pred_check_branch
      %90 = sbr.rel (0) target = $region33
    $region32: #{tpu_custom_call.1} parent=1 // pred_region
      _
    $region33: #{tpu_custom_call.1} parent=1 // pred_fallthru
      _
    // Predicated region
    $region34: #{tpu_custom_call.1} parent=1 // pred_check
      _
    $region35: #{tpu_custom_call.1} parent=1 // pred_check_branch
      %92 = sbr.rel (0) target = $region37
    $region36: #{tpu_custom_call.1} parent=1 // pred_region
      %s94 = ssub.s32 1024, 1024
      %95 = vsyncadd [#allocation12], %s94
      %s96 = sshll.u32 [#allocation11], 4
      %s97 = int_to_ptr.vmem [resolvable:$true] %s96
      %102 = dma.hbm_to_vmem [thread:$0]  %s8, 1024, %s97, [#allocation12], 64, 64, 4
    $region37: #{tpu_custom_call.1} parent=1 // pred_fallthru
      _
    // Predicated region
    $region38: #{tpu_custom_call.1} parent=1 // pred_check
      _
    $region39: #{tpu_custom_call.1} parent=1 // pred_check_branch
      %104 = sbr.rel (0) target = $region41
    $region40: #{tpu_custom_call.1} parent=1 // pred_region
      _
    $region41: #{tpu_custom_call.1} parent=1 // pred_fallthru
      _
    // Predicated region
    $region42: #{tpu_custom_call.1} parent=1 // pred_check
      _
    $region43: #{tpu_custom_call.1} parent=1 // pred_check_branch
      %106 = sbr.rel (0) target = $region45
    $region44: #{tpu_custom_call.1} parent=1 // pred_region
      %s108 = ssub.s32 1024, 1024
      %109 = vsyncadd [#allocation12], %s108
      %s110 = sshll.u32 [#allocation13], 4
      %s111 = int_to_ptr.vmem [resolvable:$true] %s110
      %116 = dma.hbm_to_vmem [thread:$0]  %s10, 1024, %s111, [#allocation12], 64, 64, 4
    $region45: #{tpu_custom_call.1} parent=1 // pred_fallthru
      _
    // Predicated region
    $region46: #{tpu_custom_call.1} parent=1 // pred_check
      _
    $region47: #{tpu_custom_call.1} parent=1 // pred_check_branch
      %118 = sbr.rel (0) target = $region49
    $region48: #{tpu_custom_call.1} parent=1 // pred_region
      _
    $region49: #{tpu_custom_call.1} parent=1 // pred_fallthru
      _
    // Predicated region
    $region50: #{tpu_custom_call.1} parent=1 // pred_check
      _
    $region51: #{tpu_custom_call.1} parent=1 // pred_check_branch
      %120 = sbr.rel (0) target = $region53
    $region52: #{tpu_custom_call.1} parent=1 // pred_region
      %s122 = ssub.s32 1024, 1024
      %123 = vsyncadd [#allocation15], %s122
      %s124 = sshll.u32 [#allocation14], 4
      %s125 = int_to_ptr.vmem [resolvable:$true] %s124
      %130 = dma.hbm_to_vmem [thread:$0]  %s12, 1024, %s125, [#allocation15], 64, 64, 4
    $region53: #{tpu_custom_call.1} parent=1 // pred_fallthru
      _
    // Predicated region
    $region54: #{tpu_custom_call.1} parent=1 // pred_check
      _
    $region55: #{tpu_custom_call.1} parent=1 // pred_check_branch
      %132 = sbr.rel (0) target = $region57
    $region56: #{tpu_custom_call.1} parent=1 // pred_region
      _
    $region57: #{tpu_custom_call.1} parent=1 // pred_fallthru
      _
    // Predicated region
    $region58: #{tpu_custom_call.1} parent=1 // pred_check
      _
    $region59: #{tpu_custom_call.1} parent=1 // pred_check_branch
      %134 = sbr.rel (0) target = $region61
    $region60: #{tpu_custom_call.1} parent=1 // pred_region
      %135 = dma.done [#allocation3], 64
    $region61: #{tpu_custom_call.1} parent=1 // pred_fallthru
      _
    // Predicated region
    $region62: #{tpu_custom_call.1} parent=1 // pred_check
      _
    $region63: #{tpu_custom_call.1} parent=1 // pred_check_branch
      %137 = sbr.rel (0) target = $region65
    $region64: #{tpu_custom_call.1} parent=1 // pred_region
      %138 = dma.done [#allocation6], 128
    $region65: #{tpu_custom_call.1} parent=1 // pred_fallthru
      _
    // Predicated region
    $region66: #{tpu_custom_call.1} parent=1 // pred_check
      _
    $region67: #{tpu_custom_call.1} parent=1 // pred_check_branch
      %140 = sbr.rel (0) target = $region69
    $region68: #{tpu_custom_call.1} parent=1 // pred_region
      %141 = dma.done [#allocation6], 1024
    $region69: #{tpu_custom_call.1} parent=1 // pred_fallthru
      _
    // Predicated region
    $region70: #{tpu_custom_call.1} parent=1 // pred_check
      _
    $region71: #{tpu_custom_call.1} parent=1 // pred_check_branch
      %143 = sbr.rel (0) target = $region73
    $region72: #{tpu_custom_call.1} parent=1 // pred_region
      %144 = dma.done [#allocation9], 1024
    $region73: #{tpu_custom_call.1} parent=1 // pred_fallthru
      _
    // Predicated region
    $region74: #{tpu_custom_call.1} parent=1 // pred_check
      _
    $region75: #{tpu_custom_call.1} parent=1 // pred_check_branch
      %146 = sbr.rel (0) target = $region77
    $region76: #{tpu_custom_call.1} parent=1 // pred_region
      %147 = dma.done [#allocation9], 2048
    $region77: #{tpu_custom_call.1} parent=1 // pred_fallthru
      _
    // Predicated region
    $region78: #{tpu_custom_call.1} parent=1 // pred_check
      _
    $region79: #{tpu_custom_call.1} parent=1 // pred_check_branch
      %149 = sbr.rel (0) target = $region81
    $region80: #{tpu_custom_call.1} parent=1 // pred_region
      %150 = dma.done [#allocation12], 1024
    $region81: #{tpu_custom_call.1} parent=1 // pred_fallthru
      _
    // Predicated region
    $region82: #{tpu_custom_call.1} parent=1 // pred_check
      _
    $region83: #{tpu_custom_call.1} parent=1 // pred_check_branch
      %152 = sbr.rel (0) target = $region85
    $region84: #{tpu_custom_call.1} parent=1 // pred_region
      %153 = dma.done [#allocation12], 1024
    $region85: #{tpu_custom_call.1} parent=1 // pred_fallthru
      _
    // Predicated region
    $region86: #{tpu_custom_call.1} parent=1 // pred_check
      _
    $region87: #{tpu_custom_call.1} parent=1 // pred_check_branch
      %155 = sbr.rel (0) target = $region89
    $region88: #{tpu_custom_call.1} parent=1 // pred_region
      %156 = dma.done [#allocation15], 1024
    $region89: #{tpu_custom_call.1} parent=1 // pred_fallthru
      _
    %v158 = vld [vmem:[#allocation2] sm:$0xf]
    %v159 = vld [vmem:[#allocation7] sm:$0xf]
    %v160 = vld [vmem:[#allocation7 + $0x4] sm:$0xf]
    %v161 = vld [vmem:[#allocation7 + $0x8] sm:$0xf]
    %v162 = vld [vmem:[#allocation7 + $0xc] sm:$0xf]
    %v163 = vld [vmem:[#allocation7 + $0x10] sm:$0xf]
    %v164 = vld [vmem:[#allocation7 + $0x14] sm:$0xf]
    %v165 = vld [vmem:[#allocation7 + $0x18] sm:$0xf]
    %v166 = vld [vmem:[#allocation7 + $0x1c] sm:$0xf]
    %v167 = vld [vmem:[#allocation7 + $0x20] sm:$0xf]
    %v168 = vld [vmem:[#allocation7 + $0x24] sm:$0xf]
    %v169 = vld [vmem:[#allocation7 + $0x28] sm:$0xf]
    %v170 = vld [vmem:[#allocation7 + $0x2c] sm:$0xf]
    %v171 = vld [vmem:[#allocation7 + $0x30] sm:$0xf]
    %v172 = vld [vmem:[#allocation7 + $0x34] sm:$0xf]
    %v173 = vld [vmem:[#allocation7 + $0x38] sm:$0xf]
    %v174 = vld [vmem:[#allocation7 + $0x3c] sm:$0xf]
    %v175 = vld [vmem:[%s3] sm:$0x1]
    %v177 = vlaneseq
    %v178 = vshrl.u32 %v177, 7
    %v179 = vsub.s32 0, %v178
    %v180 = vrot.slane %v175, %v179
    %v198 = vunpack.c.l.b16 %v159
    %v199 = vunpack.c.l.b16 %v160
    %v200 = vunpack.c.l.b16 %v161
    %v201 = vunpack.c.l.b16 %v162
    %v202 = vunpack.c.l.b16 %v163
    %v203 = vunpack.c.l.b16 %v164
    %v204 = vunpack.c.l.b16 %v165
    %v205 = vunpack.c.l.b16 %v166
    %v206 = vunpack.c.l.b16 %v167
    %v207 = vunpack.c.l.b16 %v168
    %v208 = vunpack.c.l.b16 %v169
    %v209 = vunpack.c.l.b16 %v170
    %v210 = vunpack.c.l.b16 %v171
    %v211 = vunpack.c.l.b16 %v172
    %v212 = vunpack.c.l.b16 %v173
    %v213 = vunpack.c.l.b16 %v174
    %v214 = vpack.c.b16 %v199, %v198
    %v215 = vpack.c.b16 %v201, %v200
    %v216 = vpack.c.b16 %v203, %v202
    %v217 = vpack.c.b16 %v205, %v204
    %v218 = vpack.c.b16 %v207, %v206
    %v219 = vpack.c.b16 %v209, %v208
    %v220 = vpack.c.b16 %v211, %v210
    %v221 = vpack.c.b16 %v213, %v212
    %230 = vmatprep.subr.bf16.mxu0 0
    %231 = vmatpush1.bf16.msra.mxu0 %v214
    %232 = vmatprep.subr.bf16.mxu0 0
    %233 = vmatpush1.bf16.msra.mxu0 %v215
    %234 = vmatprep.subr.bf16.mxu0 0
    %235 = vmatpush1.bf16.msra.mxu0 %v216
    %236 = vmatprep.subr.bf16.mxu0 0
    %237 = vmatpush1.bf16.msra.mxu0 %v217
    %238 = vmatprep.subr.bf16.mxu0 0
    %239 = vmatpush1.bf16.msra.mxu0 %v218
    %240 = vmatprep.subr.bf16.mxu0 0
    %241 = vmatpush1.bf16.msra.mxu0 %v219
    %242 = vmatprep.subr.bf16.mxu0 0
    %243 = vmatpush1.bf16.msra.mxu0 %v220
    %244 = vmatprep.subr.bf16.mxu0 0
    %245 = vmatpush1.bf16.msra.mxu0 %v221
    %246 = vmatprep.subr.bf16.mxu0 0
    %247 = vmatpush1.bf16.msra.mxu0 0
    %248 = vmatprep.subr.bf16.mxu0 0
    %249 = vmatpush1.bf16.msra.mxu0 0
    %250 = vmatprep.subr.bf16.mxu0 0
    %251 = vmatpush1.bf16.msra.mxu0 0
    %252 = vmatprep.subr.bf16.mxu0 0
    %253 = vmatpush1.bf16.msra.mxu0 0
    %254 = vmatprep.subr.bf16.mxu0 0
    %255 = vmatpush1.bf16.msra.mxu0 0
    %256 = vmatprep.subr.bf16.mxu0 0
    %257 = vmatpush1.bf16.msra.mxu0 0
    %258 = vmatprep.subr.bf16.mxu0 0
    %259 = vmatpush1.bf16.msra.mxu0 0
    %260 = vmatprep.subr.bf16.mxu0 0
    %261 = vmatpush1.bf16.msra.mxu0 0
    %262 = vmatprep.mubr.bf16.mxu0 0
    %263 = vmatmul.mubr.bf16.gmra.mrb[0].mxu0 %v158
    %v264 = vpop.f32.mrb[0].mxu0
    %v265 = vadd.f32 %v180, %v264
    %v266 = vpop.f32.mrb[0].mxu0
    %v267 = vpop.f32.mrb[0].mxu0
    %v268 = vpop.f32.mrb[0].mxu0
    %269 = vdwg.mxu0
    %v270 = vmax.f32 %v265, 0.0
    %v271 = vpack.c.bf16 %v270, %v270
    %v272 = vld [vmem:[#allocation8] sm:$0xf]
    %v273 = vld [vmem:[#allocation8 + $0x4] sm:$0xf]
    %v274 = vld [vmem:[#allocation8 + $0x8] sm:$0xf]
    %v275 = vld [vmem:[#allocation8 + $0xc] sm:$0xf]
    %v276 = vld [vmem:[#allocation8 + $0x10] sm:$0xf]
    %v277 = vld [vmem:[#allocation8 + $0x14] sm:$0xf]
    %v278 = vld [vmem:[#allocation8 + $0x18] sm:$0xf]
    %v279 = vld [vmem:[#allocation8 + $0x1c] sm:$0xf]
    %v280 = vld [vmem:[#allocation8 + $0x20] sm:$0xf]
    %v281 = vld [vmem:[#allocation8 + $0x24] sm:$0xf]
    %v282 = vld [vmem:[#allocation8 + $0x28] sm:$0xf]
    %v283 = vld [vmem:[#allocation8 + $0x2c] sm:$0xf]
    %v284 = vld [vmem:[#allocation8 + $0x30] sm:$0xf]
    %v285 = vld [vmem:[#allocation8 + $0x34] sm:$0xf]
    %v286 = vld [vmem:[#allocation8 + $0x38] sm:$0xf]
    %v287 = vld [vmem:[#allocation8 + $0x3c] sm:$0xf]
    %v288 = vld [vmem:[%s5] sm:$0x1]
    %v290 = vlaneseq
    %v291 = vshrl.u32 %v290, 7
    %v292 = vsub.s32 0, %v291
    %v293 = vrot.slane %v288, %v292
    %v311 = vunpack.c.l.b16 %v272
    %v312 = vunpack.c.l.b16 %v273
    %v313 = vunpack.c.l.b16 %v274
    %v314 = vunpack.c.l.b16 %v275
    %v315 = vunpack.c.l.b16 %v276
    %v316 = vunpack.c.l.b16 %v277
    %v317 = vunpack.c.l.b16 %v278
    %v318 = vunpack.c.l.b16 %v279
    %v319 = vunpack.c.l.b16 %v280
    %v320 = vunpack.c.l.b16 %v281
    %v321 = vunpack.c.l.b16 %v282
    %v322 = vunpack.c.l.b16 %v283
    %v323 = vunpack.c.l.b16 %v284
    %v324 = vunpack.c.l.b16 %v285
    %v325 = vunpack.c.l.b16 %v286
    %v326 = vunpack.c.l.b16 %v287
    %v327 = vpack.c.b16 %v312, %v311
    %v328 = vpack.c.b16 %v314, %v313
    %v329 = vpack.c.b16 %v316, %v315
    %v330 = vpack.c.b16 %v318, %v317
    %v331 = vpack.c.b16 %v320, %v319
    %v332 = vpack.c.b16 %v322, %v321
    %v333 = vpack.c.b16 %v324, %v323
    %v334 = vpack.c.b16 %v326, %v325
    %343 = vmatprep.subr.bf16.mxu0 0
    %344 = vmatpush1.bf16.msra.mxu0 %v327
    %345 = vmatprep.subr.bf16.mxu0 0
    %346 = vmatpush1.bf16.msra.mxu0 %v328
    %347 = vmatprep.subr.bf16.mxu0 0
    %348 = vmatpush1.bf16.msra.mxu0 %v329
    %349 = vmatprep.subr.bf16.mxu0 0
    %350 = vmatpush1.bf16.msra.mxu0 %v330
    %351 = vmatprep.subr.bf16.mxu0 0
    %352 = vmatpush1.bf16.msra.mxu0 %v331
    %353 = vmatprep.subr.bf16.mxu0 0
    %354 = vmatpush1.bf16.msra.mxu0 %v332
    %355 = vmatprep.subr.bf16.mxu0 0
    %356 = vmatpush1.bf16.msra.mxu0 %v333
    %357 = vmatprep.subr.bf16.mxu0 0
    %358 = vmatpush1.bf16.msra.mxu0 %v334
    %359 = vmatprep.subr.bf16.mxu0 0
    %360 = vmatpush1.bf16.msra.mxu0 0
    %361 = vmatprep.subr.bf16.mxu0 0
    %362 = vmatpush1.bf16.msra.mxu0 0
    %363 = vmatprep.subr.bf16.mxu0 0
    %364 = vmatpush1.bf16.msra.mxu0 0
    %365 = vmatprep.subr.bf16.mxu0 0
    %366 = vmatpush1.bf16.msra.mxu0 0
    %367 = vmatprep.subr.bf16.mxu0 0
    %368 = vmatpush1.bf16.msra.mxu0 0
    %369 = vmatprep.subr.bf16.mxu0 0
    %370 = vmatpush1.bf16.msra.mxu0 0
    %371 = vmatprep.subr.bf16.mxu0 0
    %372 = vmatpush1.bf16.msra.mxu0 0
    %373 = vmatprep.subr.bf16.mxu0 0
    %374 = vmatpush1.bf16.msra.mxu0 0
    %375 = vmatprep.mubr.bf16.mxu0 0
    %376 = vmatmul.mubr.bf16.gmra.mrb[0].mxu0 %v271
    %v377 = vpop.f32.mrb[0].mxu0
    %v378 = vadd.f32 %v293, %v377
    %v379 = vpop.f32.mrb[0].mxu0
    %v380 = vpop.f32.mrb[0].mxu0
    %v381 = vpop.f32.mrb[0].mxu0
    %382 = vdwg.mxu0
    %v383 = vmax.f32 %v378, 0.0
    %v384 = vpack.c.bf16 %v383, %v383
    %v385 = vld [vmem:[#allocation10] sm:$0xff]
    %v386 = vld [vmem:[#allocation10 + $0x8] sm:$0xff]
    %v387 = vld [vmem:[#allocation10 + $0x10] sm:$0xff]
    %v388 = vld [vmem:[#allocation10 + $0x18] sm:$0xff]
    %v389 = vld [vmem:[#allocation10 + $0x20] sm:$0xff]
    %v390 = vld [vmem:[#allocation10 + $0x28] sm:$0xff]
    %v391 = vld [vmem:[#allocation10 + $0x30] sm:$0xff]
    %v392 = vld [vmem:[#allocation10 + $0x38] sm:$0xff]
    %v393 = vld [vmem:[#allocation10 + $0x40] sm:$0xff]
    %v394 = vld [vmem:[#allocation10 + $0x48] sm:$0xff]
    %v395 = vld [vmem:[#allocation10 + $0x50] sm:$0xff]
    %v396 = vld [vmem:[#allocation10 + $0x58] sm:$0xff]
    %v397 = vld [vmem:[#allocation10 + $0x60] sm:$0xff]
    %v398 = vld [vmem:[#allocation10 + $0x68] sm:$0xff]
    %v399 = vld [vmem:[#allocation10 + $0x70] sm:$0xff]
    %v400 = vld [vmem:[#allocation10 + $0x78] sm:$0xff]
    %v401 = vld [vmem:[%s7] sm:$0x3]
    %v403 = vlaneseq
    %v404 = vshrl.u32 %v403, 7
    %v405 = vsub.s32 0, %v404
    %v406 = vrot.slane %v401, %v405
    %v407 = vlaneseq
    %v408 = vshrl.u32 %v407, 7
    %v409 = vsub.s32 1, %v408
    %v410 = vrot.slane %v401, %v409
    %v429 = vunpack.c.l.b16 %v385
    %v430 = vunpack.c.h.b16 %v385
    %v431 = vunpack.c.l.b16 %v386
    %v432 = vunpack.c.h.b16 %v386
    %v433 = vunpack.c.l.b16 %v387
    %v434 = vunpack.c.h.b16 %v387
    %v435 = vunpack.c.l.b16 %v388
    %v436 = vunpack.c.h.b16 %v388
    %v437 = vunpack.c.l.b16 %v389
    %v438 = vunpack.c.h.b16 %v389
    %v439 = vunpack.c.l.b16 %v390
    %v440 = vunpack.c.h.b16 %v390
    %v441 = vunpack.c.l.b16 %v391
    %v442 = vunpack.c.h.b16 %v391
    %v443 = vunpack.c.l.b16 %v392
    %v444 = vunpack.c.h.b16 %v392
    %v445 = vunpack.c.l.b16 %v393
    %v446 = vunpack.c.h.b16 %v393
    %v447 = vunpack.c.l.b16 %v394
    %v448 = vunpack.c.h.b16 %v394
    %v449 = vunpack.c.l.b16 %v395
    %v450 = vunpack.c.h.b16 %v395
    %v451 = vunpack.c.l.b16 %v396
    %v452 = vunpack.c.h.b16 %v396
    %v453 = vunpack.c.l.b16 %v397
    %v454 = vunpack.c.h.b16 %v397
    %v455 = vunpack.c.l.b16 %v398
    %v456 = vunpack.c.h.b16 %v398
    %v457 = vunpack.c.l.b16 %v399
    %v458 = vunpack.c.h.b16 %v399
    %v459 = vunpack.c.l.b16 %v400
    %v460 = vunpack.c.h.b16 %v400
    %v461 = vpack.c.b16 %v431, %v429
    %v462 = vpack.c.b16 %v432, %v430
    %v463 = vpack.c.b16 %v435, %v433
    %v464 = vpack.c.b16 %v436, %v434
    %v465 = vpack.c.b16 %v439, %v437
    %v466 = vpack.c.b16 %v440, %v438
    %v467 = vpack.c.b16 %v443, %v441
    %v468 = vpack.c.b16 %v444, %v442
    %v469 = vpack.c.b16 %v447, %v445
    %v470 = vpack.c.b16 %v448, %v446
    %v471 = vpack.c.b16 %v451, %v449
    %v472 = vpack.c.b16 %v452, %v450
    %v473 = vpack.c.b16 %v455, %v453
    %v474 = vpack.c.b16 %v456, %v454
    %v475 = vpack.c.b16 %v459, %v457
    %v476 = vpack.c.b16 %v460, %v458
    %493 = vmatprep.subr.bf16.mxu0 %v462
    %494 = vmatpush1.bf16.msra.mxu0 %v461
    %495 = vmatprep.subr.bf16.mxu0 %v464
    %496 = vmatpush1.bf16.msra.mxu0 %v463
    %497 = vmatprep.subr.bf16.mxu0 %v466
    %498 = vmatpush1.bf16.msra.mxu0 %v465
    %499 = vmatprep.subr.bf16.mxu0 %v468
    %500 = vmatpush1.bf16.msra.mxu0 %v467
    %501 = vmatprep.subr.bf16.mxu0 %v470
    %502 = vmatpush1.bf16.msra.mxu0 %v469
    %503 = vmatprep.subr.bf16.mxu0 %v472
    %504 = vmatpush1.bf16.msra.mxu0 %v471
    %505 = vmatprep.subr.bf16.mxu0 %v474
    %506 = vmatpush1.bf16.msra.mxu0 %v473
    %507 = vmatprep.subr.bf16.mxu0 %v476
    %508 = vmatpush1.bf16.msra.mxu0 %v475
    %509 = vmatprep.subr.bf16.mxu0 0
    %510 = vmatpush1.bf16.msra.mxu0 0
    %511 = vmatprep.subr.bf16.mxu0 0
    %512 = vmatpush1.bf16.msra.mxu0 0
    %513 = vmatprep.subr.bf16.mxu0 0
    %514 = vmatpush1.bf16.msra.mxu0 0
    %515 = vmatprep.subr.bf16.mxu0 0
    %516 = vmatpush1.bf16.msra.mxu0 0
    %517 = vmatprep.subr.bf16.mxu0 0
    %518 = vmatpush1.bf16.msra.mxu0 0
    %519 = vmatprep.subr.bf16.mxu0 0
    %520 = vmatpush1.bf16.msra.mxu0 0
    %521 = vmatprep.subr.bf16.mxu0 0
    %522 = vmatpush1.bf16.msra.mxu0 0
    %523 = vmatprep.subr.bf16.mxu0 0
    %524 = vmatpush1.bf16.msra.mxu0 0
    %525 = vmatprep.mubr.bf16.mxu0 0
    %526 = vmatmul.mubr.bf16.gmra.mrb[0].mxu0 %v384
    %v527 = vpop.f32.mrb[0].mxu0
    %v528 = vadd.f32 %v406, %v527
    %v529 = vpop.f32.mrb[0].mxu0
    %v530 = vadd.f32 %v410, %v529
    %v531 = vpop.f32.mrb[0].mxu0
    %v532 = vpop.f32.mrb[0].mxu0
    %533 = vdwg.mxu0
    %v534 = vmul.f32 %v530, 0.5
    %v535 = vmul.f32 %v534, 1.442695
    %v536 = vpow.pop %v535
    %v537 = vld [vmem:[#allocation5] sm:$0xff]
    %v538 = vmul.f32 %v537, %v536
    %v539 = vadd.f32 %v528, %v538
    %v540 = vpack.c.bf16 %v539, %v539
    %v541 = vld [vmem:[#allocation11] sm:$0xf]
    %v542 = vld [vmem:[#allocation11 + $0x4] sm:$0xf]
    %v543 = vld [vmem:[#allocation11 + $0x8] sm:$0xf]
    %v544 = vld [vmem:[#allocation11 + $0xc] sm:$0xf]
    %v545 = vld [vmem:[#allocation11 + $0x10] sm:$0xf]
    %v546 = vld [vmem:[#allocation11 + $0x14] sm:$0xf]
    %v547 = vld [vmem:[#allocation11 + $0x18] sm:$0xf]
    %v548 = vld [vmem:[#allocation11 + $0x1c] sm:$0xf]
    %v549 = vld [vmem:[#allocation11 + $0x20] sm:$0xf]
    %v550 = vld [vmem:[#allocation11 + $0x24] sm:$0xf]
    %v551 = vld [vmem:[#allocation11 + $0x28] sm:$0xf]
    %v552 = vld [vmem:[#allocation11 + $0x2c] sm:$0xf]
    %v553 = vld [vmem:[#allocation11 + $0x30] sm:$0xf]
    %v554 = vld [vmem:[#allocation11 + $0x34] sm:$0xf]
    %v555 = vld [vmem:[#allocation11 + $0x38] sm:$0xf]
    %v556 = vld [vmem:[#allocation11 + $0x3c] sm:$0xf]
    %v557 = vld [vmem:[%s9] sm:$0x1]
    %v559 = vlaneseq
    %v560 = vshrl.u32 %v559, 7
    %v561 = vsub.s32 0, %v560
    %v562 = vrot.slane %v557, %v561
    %v580 = vunpack.c.l.b16 %v541
    %v581 = vunpack.c.l.b16 %v542
    %v582 = vunpack.c.l.b16 %v543
    %v583 = vunpack.c.l.b16 %v544
    %v584 = vunpack.c.l.b16 %v545
    %v585 = vunpack.c.l.b16 %v546
    %v586 = vunpack.c.l.b16 %v547
    %v587 = vunpack.c.l.b16 %v548
    %v588 = vunpack.c.l.b16 %v549
    %v589 = vunpack.c.l.b16 %v550
    %v590 = vunpack.c.l.b16 %v551
    %v591 = vunpack.c.l.b16 %v552
    %v592 = vunpack.c.l.b16 %v553
    %v593 = vunpack.c.l.b16 %v554
    %v594 = vunpack.c.l.b16 %v555
    %v595 = vunpack.c.l.b16 %v556
    %v596 = vpack.c.b16 %v581, %v580
    %v597 = vpack.c.b16 %v583, %v582
    %v598 = vpack.c.b16 %v585, %v584
    %v599 = vpack.c.b16 %v587, %v586
    %v600 = vpack.c.b16 %v589, %v588
    %v601 = vpack.c.b16 %v591, %v590
    %v602 = vpack.c.b16 %v593, %v592
    %v603 = vpack.c.b16 %v595, %v594
    %612 = vmatprep.subr.bf16.mxu0 0
    %613 = vmatpush1.bf16.msra.mxu0 %v596
    %614 = vmatprep.subr.bf16.mxu0 0
    %615 = vmatpush1.bf16.msra.mxu0 %v597
    %616 = vmatprep.subr.bf16.mxu0 0
    %617 = vmatpush1.bf16.msra.mxu0 %v598
    %618 = vmatprep.subr.bf16.mxu0 0
    %619 = vmatpush1.bf16.msra.mxu0 %v599
    %620 = vmatprep.subr.bf16.mxu0 0
    %621 = vmatpush1.bf16.msra.mxu0 %v600
    %622 = vmatprep.subr.bf16.mxu0 0
    %623 = vmatpush1.bf16.msra.mxu0 %v601
    %624 = vmatprep.subr.bf16.mxu0 0
    %625 = vmatpush1.bf16.msra.mxu0 %v602
    %626 = vmatprep.subr.bf16.mxu0 0
    %627 = vmatpush1.bf16.msra.mxu0 %v603
    %628 = vmatprep.subr.bf16.mxu0 0
    %629 = vmatpush1.bf16.msra.mxu0 0
    %630 = vmatprep.subr.bf16.mxu0 0
    %631 = vmatpush1.bf16.msra.mxu0 0
    %632 = vmatprep.subr.bf16.mxu0 0
    %633 = vmatpush1.bf16.msra.mxu0 0
    %634 = vmatprep.subr.bf16.mxu0 0
    %635 = vmatpush1.bf16.msra.mxu0 0
    %636 = vmatprep.subr.bf16.mxu0 0
    %637 = vmatpush1.bf16.msra.mxu0 0
    %638 = vmatprep.subr.bf16.mxu0 0
    %639 = vmatpush1.bf16.msra.mxu0 0
    %640 = vmatprep.subr.bf16.mxu0 0
    %641 = vmatpush1.bf16.msra.mxu0 0
    %642 = vmatprep.subr.bf16.mxu0 0
    %643 = vmatpush1.bf16.msra.mxu0 0
    %644 = vmatprep.mubr.bf16.mxu0 0
    %645 = vmatmul.mubr.bf16.gmra.mrb[0].mxu0 %v540
    %v646 = vpop.f32.mrb[0].mxu0
    %v647 = vadd.f32 %v562, %v646
    %v648 = vpop.f32.mrb[0].mxu0
    %v649 = vpop.f32.mrb[0].mxu0
    %v650 = vpop.f32.mrb[0].mxu0
    %651 = vdwg.mxu0
    %v652 = vmax.f32 %v647, 0.0
    %v653 = vpack.c.bf16 %v652, %v652
    %v654 = vld [vmem:[#allocation13] sm:$0xf]
    %v655 = vld [vmem:[#allocation13 + $0x4] sm:$0xf]
    %v656 = vld [vmem:[#allocation13 + $0x8] sm:$0xf]
    %v657 = vld [vmem:[#allocation13 + $0xc] sm:$0xf]
    %v658 = vld [vmem:[#allocation13 + $0x10] sm:$0xf]
    %v659 = vld [vmem:[#allocation13 + $0x14] sm:$0xf]
    %v660 = vld [vmem:[#allocation13 + $0x18] sm:$0xf]
    %v661 = vld [vmem:[#allocation13 + $0x1c] sm:$0xf]
    %v662 = vld [vmem:[#allocation13 + $0x20] sm:$0xf]
    %v663 = vld [vmem:[#allocation13 + $0x24] sm:$0xf]
    %v664 = vld [vmem:[#allocation13 + $0x28] sm:$0xf]
    %v665 = vld [vmem:[#allocation13 + $0x2c] sm:$0xf]
    %v666 = vld [vmem:[#allocation13 + $0x30] sm:$0xf]
    %v667 = vld [vmem:[#allocation13 + $0x34] sm:$0xf]
    %v668 = vld [vmem:[#allocation13 + $0x38] sm:$0xf]
    %v669 = vld [vmem:[#allocation13 + $0x3c] sm:$0xf]
    %v670 = vld [vmem:[%s11] sm:$0x1]
    %v672 = vlaneseq
    %v673 = vshrl.u32 %v672, 7
    %v674 = vsub.s32 0, %v673
    %v675 = vrot.slane %v670, %v674
    %v693 = vunpack.c.l.b16 %v654
    %v694 = vunpack.c.l.b16 %v655
    %v695 = vunpack.c.l.b16 %v656
    %v696 = vunpack.c.l.b16 %v657
    %v697 = vunpack.c.l.b16 %v658
    %v698 = vunpack.c.l.b16 %v659
    %v699 = vunpack.c.l.b16 %v660
    %v700 = vunpack.c.l.b16 %v661
    %v701 = vunpack.c.l.b16 %v662
    %v702 = vunpack.c.l.b16 %v663
    %v703 = vunpack.c.l.b16 %v664
    %v704 = vunpack.c.l.b16 %v665
    %v705 = vunpack.c.l.b16 %v666
    %v706 = vunpack.c.l.b16 %v667
    %v707 = vunpack.c.l.b16 %v668
    %v708 = vunpack.c.l.b16 %v669
    %v709 = vpack.c.b16 %v694, %v693
    %v710 = vpack.c.b16 %v696, %v695
    %v711 = vpack.c.b16 %v698, %v697
    %v712 = vpack.c.b16 %v700, %v699
    %v713 = vpack.c.b16 %v702, %v701
    %v714 = vpack.c.b16 %v704, %v703
    %v715 = vpack.c.b16 %v706, %v705
    %v716 = vpack.c.b16 %v708, %v707
    %725 = vmatprep.subr.bf16.mxu0 0
    %726 = vmatpush1.bf16.msra.mxu0 %v709
    %727 = vmatprep.subr.bf16.mxu0 0
    %728 = vmatpush1.bf16.msra.mxu0 %v710
    %729 = vmatprep.subr.bf16.mxu0 0
    %730 = vmatpush1.bf16.msra.mxu0 %v711
    %731 = vmatprep.subr.bf16.mxu0 0
    %732 = vmatpush1.bf16.msra.mxu0 %v712
    %733 = vmatprep.subr.bf16.mxu0 0
    %734 = vmatpush1.bf16.msra.mxu0 %v713
    %735 = vmatprep.subr.bf16.mxu0 0
    %736 = vmatpush1.bf16.msra.mxu0 %v714
    %737 = vmatprep.subr.bf16.mxu0 0
    %738 = vmatpush1.bf16.msra.mxu0 %v715
    %739 = vmatprep.subr.bf16.mxu0 0
    %740 = vmatpush1.bf16.msra.mxu0 %v716
    %741 = vmatprep.subr.bf16.mxu0 0
    %742 = vmatpush1.bf16.msra.mxu0 0
    %743 = vmatprep.subr.bf16.mxu0 0
    %744 = vmatpush1.bf16.msra.mxu0 0
    %745 = vmatprep.subr.bf16.mxu0 0
    %746 = vmatpush1.bf16.msra.mxu0 0
    %747 = vmatprep.subr.bf16.mxu0 0
    %748 = vmatpush1.bf16.msra.mxu0 0
    %749 = vmatprep.subr.bf16.mxu0 0
    %750 = vmatpush1.bf16.msra.mxu0 0
    %751 = vmatprep.subr.bf16.mxu0 0
    %752 = vmatpush1.bf16.msra.mxu0 0
    %753 = vmatprep.subr.bf16.mxu0 0
    %754 = vmatpush1.bf16.msra.mxu0 0
    %755 = vmatprep.subr.bf16.mxu0 0
    %756 = vmatpush1.bf16.msra.mxu0 0
    %757 = vmatprep.mubr.bf16.mxu0 0
    %758 = vmatmul.mubr.bf16.gmra.mrb[0].mxu0 %v653
    %v759 = vpop.f32.mrb[0].mxu0
    %v760 = vadd.f32 %v675, %v759
    %v761 = vpop.f32.mrb[0].mxu0
    %v762 = vpop.f32.mrb[0].mxu0
    %v763 = vpop.f32.mrb[0].mxu0
    %764 = vdwg.mxu0
    %v765 = vmax.f32 %v760, 0.0
    %v766 = vpack.c.bf16 %v765, %v765
    %v767 = vld [vmem:[#allocation14] sm:$0xf]
    %v768 = vld [vmem:[#allocation14 + $0x4] sm:$0xf]
    %v769 = vld [vmem:[#allocation14 + $0x8] sm:$0xf]
    %v770 = vld [vmem:[#allocation14 + $0xc] sm:$0xf]
    %v771 = vld [vmem:[#allocation14 + $0x10] sm:$0xf]
    %v772 = vld [vmem:[#allocation14 + $0x14] sm:$0xf]
    %v773 = vld [vmem:[#allocation14 + $0x18] sm:$0xf]
    %v774 = vld [vmem:[#allocation14 + $0x1c] sm:$0xf]
    %v775 = vld [vmem:[#allocation14 + $0x20] sm:$0xf]
    %v776 = vld [vmem:[#allocation14 + $0x24] sm:$0xf]
    %v777 = vld [vmem:[#allocation14 + $0x28] sm:$0xf]
    %v778 = vld [vmem:[#allocation14 + $0x2c] sm:$0xf]
    %v779 = vld [vmem:[#allocation14 + $0x30] sm:$0xf]
    %v780 = vld [vmem:[#allocation14 + $0x34] sm:$0xf]
    %v781 = vld [vmem:[#allocation14 + $0x38] sm:$0xf]
    %v782 = vld [vmem:[#allocation14 + $0x3c] sm:$0xf]
    %v783 = vld [vmem:[%s13] sm:$0x1]
    %v785 = vlaneseq
    %v786 = vshrl.u32 %v785, 7
    %v787 = vsub.s32 0, %v786
    %v788 = vrot.slane %v783, %v787
    %v806 = vunpack.c.l.b16 %v767
    %v807 = vunpack.c.l.b16 %v768
    %v808 = vunpack.c.l.b16 %v769
    %v809 = vunpack.c.l.b16 %v770
    %v810 = vunpack.c.l.b16 %v771
    %v811 = vunpack.c.l.b16 %v772
    %v812 = vunpack.c.l.b16 %v773
    %v813 = vunpack.c.l.b16 %v774
    %v814 = vunpack.c.l.b16 %v775
    %v815 = vunpack.c.l.b16 %v776
    %v816 = vunpack.c.l.b16 %v777
    %v817 = vunpack.c.l.b16 %v778
    %v818 = vunpack.c.l.b16 %v779
    %v819 = vunpack.c.l.b16 %v780
    %v820 = vunpack.c.l.b16 %v781
    %v821 = vunpack.c.l.b16 %v782
    %v822 = vpack.c.b16 %v807, %v806
    %v823 = vpack.c.b16 %v809, %v808
    %v824 = vpack.c.b16 %v811, %v810
    %v825 = vpack.c.b16 %v813, %v812
    %v826 = vpack.c.b16 %v815, %v814
    %v827 = vpack.c.b16 %v817, %v816
    %v828 = vpack.c.b16 %v819, %v818
    %v829 = vpack.c.b16 %v821, %v820
    %838 = vmatprep.subr.bf16.mxu0 0
    %839 = vmatpush1.bf16.msra.mxu0 %v822
    %840 = vmatprep.subr.bf16.mxu0 0
    %841 = vmatpush1.bf16.msra.mxu0 %v823
    %842 = vmatprep.subr.bf16.mxu0 0
    %843 = vmatpush1.bf16.msra.mxu0 %v824
    %844 = vmatprep.subr.bf16.mxu0 0
    %845 = vmatpush1.bf16.msra.mxu0 %v825
    %846 = vmatprep.subr.bf16.mxu0 0
    %847 = vmatpush1.bf16.msra.mxu0 %v826
    %848 = vmatprep.subr.bf16.mxu0 0
    %849 = vmatpush1.bf16.msra.mxu0 %v827
    %850 = vmatprep.subr.bf16.mxu0 0
    %851 = vmatpush1.bf16.msra.mxu0 %v828
    %852 = vmatprep.subr.bf16.mxu0 0
    %853 = vmatpush1.bf16.msra.mxu0 %v829
    %854 = vmatprep.subr.bf16.mxu0 0
    %855 = vmatpush1.bf16.msra.mxu0 0
    %856 = vmatprep.subr.bf16.mxu0 0
    %857 = vmatpush1.bf16.msra.mxu0 0
    %858 = vmatprep.subr.bf16.mxu0 0
    %859 = vmatpush1.bf16.msra.mxu0 0
    %860 = vmatprep.subr.bf16.mxu0 0
    %861 = vmatpush1.bf16.msra.mxu0 0
    %862 = vmatprep.subr.bf16.mxu0 0
    %863 = vmatpush1.bf16.msra.mxu0 0
    %864 = vmatprep.subr.bf16.mxu0 0
    %865 = vmatpush1.bf16.msra.mxu0 0
    %866 = vmatprep.subr.bf16.mxu0 0
    %867 = vmatpush1.bf16.msra.mxu0 0
    %868 = vmatprep.subr.bf16.mxu0 0
    %869 = vmatpush1.bf16.msra.mxu0 0
    %870 = vmatprep.mubr.bf16.mxu0 0
    %871 = vmatmul.mubr.bf16.gmra.mrb[0].mxu0 %v766
    %v872 = vpop.f32.mrb[0].mxu0
    %v873 = vadd.f32 %v788, %v872
    %v874 = vpop.f32.mrb[0].mxu0
    %v875 = vpop.f32.mrb[0].mxu0
    %v876 = vpop.f32.mrb[0].mxu0
    %877 = vdwg.mxu0
    %878 = vst [vmem:[#allocation16] sm:$0xff] %v873
    %879 = vst [vmem:[#allocation17] sm:$0xff] %v528
    %880 = vst [vmem:[#allocation19] sm:$0xff] %v530
    // Predicated region
    $region90: #{tpu_custom_call.1} parent=1 // pred_check
      _
    $region91: #{tpu_custom_call.1} parent=1 // pred_check_branch
      %882 = sbr.rel (0) target = $region93
    $region92: #{tpu_custom_call.1} parent=1 // pred_region
      %s884 = ssub.s32 128, 128
      %885 = vsyncadd [#allocation4], %s884
      %s887 = sshll.u32 [#allocation16], 4
      %s888 = int_to_ptr.vmem [resolvable:$true] %s887
      %890 = dma.vmem_to_hbm [thread:$0]  %s888, 128, %s14, [#allocation4]
    $region93: #{tpu_custom_call.1} parent=1 // pred_fallthru
      _
    // Predicated region
    $region94: #{tpu_custom_call.1} parent=1 // pred_check
      _
    $region95: #{tpu_custom_call.1} parent=1 // pred_check_branch
      %892 = sbr.rel (0) target = $region97
    $region96: #{tpu_custom_call.1} parent=1 // pred_region
      %s894 = ssub.s32 128, 128
      %895 = vsyncadd [#allocation18], %s894
      %s897 = sshll.u32 [#allocation17], 4
      %s898 = int_to_ptr.vmem [resolvable:$true] %s897
      %900 = dma.vmem_to_hbm [thread:$0]  %s898, 128, %s15, [#allocation18]
    $region97: #{tpu_custom_call.1} parent=1 // pred_fallthru
      _
    // Predicated region
    $region98: #{tpu_custom_call.1} parent=1 // pred_check
      _
    $region99: #{tpu_custom_call.1} parent=1 // pred_check_branch
      %902 = sbr.rel (0) target = $region101
    $region100: #{tpu_custom_call.1} parent=1 // pred_region
      %s904 = ssub.s32 128, 128
      %905 = vsyncadd [#allocation18], %s904
      %s907 = sshll.u32 [#allocation19], 4
      %s908 = int_to_ptr.vmem [resolvable:$true] %s907
      %910 = dma.vmem_to_hbm [thread:$0]  %s908, 128, %s16, [#allocation18]
    $region101: #{tpu_custom_call.1} parent=1 // pred_fallthru
      _
    // Predicated region
    $region102: #{tpu_custom_call.1} parent=1 // pred_check
      _
    $region103: #{tpu_custom_call.1} parent=1 // pred_check_branch
      %912 = sbr.rel (0) target = $region105
    $region104: #{tpu_custom_call.1} parent=1 // pred_region
      %913 = dma.done [#allocation4], 128
    $region105: #{tpu_custom_call.1} parent=1 // pred_fallthru
      _
    // Predicated region
    $region106: #{tpu_custom_call.1} parent=1 // pred_check
      _
    $region107: #{tpu_custom_call.1} parent=1 // pred_check_branch
      %915 = sbr.rel (0) target = $region109
    $region108: #{tpu_custom_call.1} parent=1 // pred_region
      %916 = dma.done [#allocation18], 128
    $region109: #{tpu_custom_call.1} parent=1 // pred_fallthru
      _
    // Predicated region
    $region110: #{tpu_custom_call.1} parent=1 // pred_check
      _
    $region111: #{tpu_custom_call.1} parent=1 // pred_check_branch
      %918 = sbr.rel (0) target = $region113
    $region112: #{tpu_custom_call.1} parent=1 // pred_region
      %919 = dma.done [#allocation18], 128
    $region113: #{tpu_custom_call.1} parent=1 // pred_fallthru
      _
    %920 = vsyncpa [#allocation3], 1
    %921 = vsyncpa [#allocation6], 1
    %922 = vsyncpa [#allocation9], 1
    %923 = vsyncpa [#allocation12], 1
    %924 = vsyncpa [#allocation15], 1
    %925 = vsyncpa [#allocation4], 1
    %926 = vsyncpa [#allocation18], 1

</llo_original>
